<compile_context>
chip_gen: v5e
topology: v5e:2x2
jax: 0.10.0
libtpu: 0.0.40
codegen_flags: <defaults>
</compile_context>

<pallas_src>
import functools

import jax
import jax.numpy as jnp
from jax import lax
from jax.experimental import pallas as pl
from jax.experimental.pallas import tpu as pltpu

LANE = 128
SUBLANE = 8
MAX_TILE_ROWS = 2048          # 2048 x 128 x 4B = 1 MiB per f32 block
_INV_2_23 = float(1.0 / (1 << 23))
_TWO_PI = 6.283185307179586


def _gaussian_noise_kernel(x_ref, bits_ref, o_ref, *, sigma):
    """out = x + sigma * N(0, 1), one 32-bit random draw per output element.

    The block is split into two row halves: top-half bits -> u1, bottom-half
    bits -> u2; the Box-Muller pair (r*cos, r*sin) covers both halves, so
    log/sqrt are shared across two outputs.
    """
    half = x_ref.shape[0] // 2

    # 23-bit uniforms from the int32 bit pool (bits 9..31), exactly representable in f32.
    b1 = (bits_ref[:half, :] >> 9) & jnp.int32(0x7FFFFF)
    b2 = (bits_ref[half:, :] >> 9) & jnp.int32(0x7FFFFF)
    u1 = 1.0 - b1.astype(jnp.float32) * jnp.float32(_INV_2_23)   # (0, 1] -> log-safe
    u2 = b2.astype(jnp.float32) * jnp.float32(_INV_2_23)         # [0, 1)

    r = jnp.sqrt(-2.0 * jnp.log(u1)) * jnp.float32(sigma)
    theta = jnp.float32(_TWO_PI) * u2
    z_top = r * jnp.cos(theta)
    z_bot = r * jnp.sin(theta)

    # Add in f32, cast to the output dtype once.
    x = x_ref[...].astype(jnp.float32)
    o_ref[:half, :] = (x[:half, :] + z_top).astype(o_ref.dtype)
    o_ref[half:, :] = (x[half:, :] + z_bot).astype(o_ref.dtype)


def gaussian_noise(x, key, sigma=1.0, training=True):
    """Pallas implementation of GaussianNoise.forward.

    Eval mode (training=False) is the identity, exactly like the PyTorch module.
    """
    if not training:
        return x

    orig_shape = x.shape
    dtype = x.dtype
    n = x.size
    flat = x.reshape(-1)

    key_main, key_tail = jax.random.split(key)

    # Bulk slab: rows of 128 lanes, tile_rows a multiple of 8 that exactly
    # divides the slab (no partial blocks -> no masked/garbage-bit edge cases).
    rows_total = n // LANE
    if rows_total >= MAX_TILE_ROWS:
        tile_rows = MAX_TILE_ROWS
    else:
        tile_rows = (rows_total // SUBLANE) * SUBLANE
    rows_main = (rows_total // tile_rows) * tile_rows if tile_rows else 0
    n_main = rows_main * LANE

    pieces = []
    if rows_main:
        x2d = flat[:n_main].reshape(rows_main, LANE)
        bits = jax.random.bits(key_main, (rows_main, LANE), dtype=jnp.uint32)
        bits = lax.bitcast_convert_type(bits, jnp.int32)

        kernel = functools.partial(_gaussian_noise_kernel, sigma=float(sigma))
        block = pl.BlockSpec((tile_rows, LANE), lambda i: (i, 0))

        out2d = pl.pallas_call(
            kernel,
            out_shape=jax.ShapeDtypeStruct((rows_main, LANE), dtype),
            grid=(rows_main // tile_rows,),
            in_specs=[block, block],
            out_specs=block,
            compiler_params=pltpu.CompilerParams(
                dimension_semantics=("parallel",)),
        )(x2d, bits)
        pieces.append(out2d.reshape(-1))

    if n_main < n:
        # Ragged tail (smaller than one tile): plain-JAX add, negligible cost.
        tail = flat[n_main:]
        noise = sigma * jax.random.normal(key_tail, tail.shape, dtype=jnp.float32)
        pieces.append((tail.astype(jnp.float32) + noise).astype(dtype))

    out = pieces[0] if len(pieces) == 1 else jnp.concatenate(pieces)
    return out.reshape(orig_shape)


if __name__ == "__main__":
    key = jax.random.PRNGKey(0)
    key_x, key_noise = jax.random.split(key)
    x = jax.random.normal(key_x, (2, 4, 16, 16), dtype=jnp.float32)  # NCHW

    sigma = 1.0
    out = gaussian_noise(x, key_noise, sigma=sigma, training=True)
    out = jax.block_until_ready(out)

    assert out.shape == x.shape and out.dtype == x.dtype

    # Sanity: noise was actually added (training mode), roughly N(0, 1).
    noise = out - x
    assert float(jnp.max(jnp.abs(noise))) > 0.0
    noise_std = float(jnp.std(noise))
    assert 0.5 < noise_std < 1.5, f"unexpected noise std {noise_std}"
    noise_mean = float(jnp.mean(noise))
    assert abs(noise_mean) < 0.25, f"unexpected noise mean {noise_mean}"

    # Eval mode is identity.
    out_eval = gaussian_noise(x, key_noise, sigma=sigma, training=False)
    assert bool(jnp.all(out_eval == x))

    print("KERNEL_OK")
</pallas_src>

<mosaic_0001>
module attributes {stable_mosaic.version = 11 : i64} {
  func.func @_gaussian_noise_kernel(%arg0: i32, %arg1: memref<16x128xf32, #tpu.memory_space<vmem>>, %arg2: memref<16x128xi32, #tpu.memory_space<vmem>>, %arg3: memref<16x128xf32, #tpu.memory_space<vmem>>) attributes {dimension_semantics = [#tpu.dimension_semantics<parallel>], iteration_bounds = array<i64: 1>, scalar_prefetch = 0 : i64, scratch_operands = 0 : i64, tpu.core_type = #tpu.core_type<tc>, window_params = [{transform_indices = @transform_0, window_bounds = array<i64: 16, 128>}, {transform_indices = @transform_1, window_bounds = array<i64: 16, 128>}, {transform_indices = @transform_2, window_bounds = array<i64: 16, 128>}]} {
    %c0 = arith.constant 0 : index
    %c0_0 = arith.constant 0 : index
    %0 = vector.load %arg2[%c0, %c0_0] : memref<16x128xi32, #tpu.memory_space<vmem>>, vector<8x128xi32>
    %c9_i32 = arith.constant 9 : i32
    %1 = vector.broadcast %c9_i32 : i32 to vector<8x128xi32>
    %2 = arith.shrsi %0, %1 : vector<8x128xi32>
    %c8388607_i32 = arith.constant 8388607 : i32
    %3 = vector.broadcast %c8388607_i32 : i32 to vector<8x128xi32>
    %4 = arith.andi %2, %3 : vector<8x128xi32>
    %c8 = arith.constant 8 : index
    %c0_1 = arith.constant 0 : index
    %5 = vector.load %arg2[%c8, %c0_1] : memref<16x128xi32, #tpu.memory_space<vmem>>, vector<8x128xi32>
    %c9_i32_2 = arith.constant 9 : i32
    %6 = vector.broadcast %c9_i32_2 : i32 to vector<8x128xi32>
    %7 = arith.shrsi %5, %6 : vector<8x128xi32>
    %c8388607_i32_3 = arith.constant 8388607 : i32
    %8 = vector.broadcast %c8388607_i32_3 : i32 to vector<8x128xi32>
    %9 = arith.andi %7, %8 : vector<8x128xi32>
    %10 = arith.sitofp %4 : vector<8x128xi32> to vector<8x128xf32>
    %cst = arith.constant 1.1920929E-7 : f32
    %11 = vector.broadcast %cst : f32 to vector<8x128xf32>
    %12 = arith.mulf %10, %11 : vector<8x128xf32>
    %cst_4 = arith.constant 1.000000e+00 : f32
    %13 = vector.broadcast %cst_4 : f32 to vector<8x128xf32>
    %14 = arith.subf %13, %12 : vector<8x128xf32>
    %15 = arith.sitofp %9 : vector<8x128xi32> to vector<8x128xf32>
    %cst_5 = arith.constant 1.1920929E-7 : f32
    %16 = vector.broadcast %cst_5 : f32 to vector<8x128xf32>
    %17 = arith.mulf %15, %16 : vector<8x128xf32>
    %18 = math.log %14 : vector<8x128xf32>
    %cst_6 = arith.constant -2.000000e+00 : f32
    %19 = vector.broadcast %cst_6 : f32 to vector<8x128xf32>
    %20 = arith.mulf %19, %18 : vector<8x128xf32>
    %21 = math.sqrt %20 : vector<8x128xf32>
    %cst_7 = arith.constant 1.000000e+00 : f32
    %22 = vector.broadcast %cst_7 : f32 to vector<8x128xf32>
    %23 = arith.mulf %21, %22 : vector<8x128xf32>
    %cst_8 = arith.constant 6.28318548 : f32
    %24 = vector.broadcast %cst_8 : f32 to vector<8x128xf32>
    %25 = arith.mulf %24, %17 : vector<8x128xf32>
    %26 = math.cos %25 : vector<8x128xf32>
    %27 = arith.mulf %23, %26 : vector<8x128xf32>
    %28 = math.sin %25 : vector<8x128xf32>
    %29 = arith.mulf %23, %28 : vector<8x128xf32>
    %c0_9 = arith.constant 0 : index
    %c0_10 = arith.constant 0 : index
    %30 = vector.load %arg1[%c0_9, %c0_10] : memref<16x128xf32, #tpu.memory_space<vmem>>, vector<16x128xf32>
    %31 = vector.extract_strided_slice %30 {offsets = [0, 0], sizes = [8, 128], strides = [1, 1]} : vector<16x128xf32> to vector<8x128xf32>
    %32 = arith.addf %31, %27 : vector<8x128xf32>
    %c0_11 = arith.constant 0 : index
    %c0_12 = arith.constant 0 : index
    %33 = vector.load %arg3[%c0_11, %c0_12] : memref<16x128xf32, #tpu.memory_space<vmem>>, vector<8x128xf32>
    tpu.vector_store %arg3[%c0_11, %c0_12], %32 {strides = array<i32>} : memref<16x128xf32, #tpu.memory_space<vmem>>, vector<8x128xf32>,
    %34 = vector.extract_strided_slice %30 {offsets = [8, 0], sizes = [8, 128], strides = [1, 1]} : vector<16x128xf32> to vector<8x128xf32>
    %35 = arith.addf %34, %29 : vector<8x128xf32>
    %c8_13 = arith.constant 8 : index
    %c0_14 = arith.constant 0 : index
    %36 = vector.load %arg3[%c8_13, %c0_14] : memref<16x128xf32, #tpu.memory_space<vmem>>, vector<8x128xf32>
    tpu.vector_store %arg3[%c8_13, %c0_14], %35 {strides = array<i32>} : memref<16x128xf32, #tpu.memory_space<vmem>>, vector<8x128xf32>,
    return
  }
  func.func @transform_0(%arg0: i32) -> (i32, i32) {
    %c0_i32 = arith.constant 0 : i32
    %c0_i32_0 = arith.constant 0 : i32
    return %arg0, %c0_i32 : i32, i32
  }
  func.func @transform_1(%arg0: i32) -> (i32, i32) {
    %c0_i32 = arith.constant 0 : i32
    %c0_i32_0 = arith.constant 0 : i32
    return %arg0, %c0_i32 : i32, i32
  }
  func.func @transform_2(%arg0: i32) -> (i32, i32) {
    %c0_i32 = arith.constant 0 : i32
    %c0_i32_0 = arith.constant 0 : i32
    return %arg0, %c0_i32 : i32, i32
  }
}

</mosaic_0001>

<llo_original>
// kernel: tpu_custom_call.1
$region0: #{tpu_custom_call.1}
  #allocation0 [shape = 'u32[]', space=smem, size = 0x4, offset = 0x4, fixed_abs, tag = 'smem constant byte address 0x4 - core index']
  #allocation1 [shape = 'u32[72,128]{1,0:T(1,128)}', space=vmem, size = 0x9000, scoped, tag = 'internal scratch']
  %s0 = inlined_call_operand.hbm [shape: f32[16,128], index: 0, kind: input, shape index: {}]
  %s1 = inlined_call_operand.hbm [shape: s32[16,128], index: 1, kind: input, shape index: {}]
  %s2 = inlined_call_operand.hbm [shape: f32[16,128], index: 2, kind: output, shape index: {}]
  %s3 = sld [smem:[#allocation0]]
  $region26: #{tpu_custom_call.1} parent=0
    _
  %s5 = ssub.s32 1, %s3
  %s6 = scalar_select 0, %s5, %s3
  $region1: #{tpu_custom_call.1} parent=0
    #allocation2 [shape = 'u8[8192]{0}', space=vmem, size = 0x2000, scoped, tag = 'input window, operand 0, single buffered']
    #allocation3 [shape = 's32[1]{0}', space=sflag, size = 0x4, scoped, tag = 'scoped memory for tpu_custom_call.1']
    #allocation4 [shape = 's32[1]{0}', space=sflag, size = 0x4, scoped, tag = 'scoped memory for tpu_custom_call.1']
    #allocation5 [shape = 'u8[8192]{0}', space=vmem, size = 0x2000, scoped, tag = 'input window, operand 1, single buffered']
    #allocation6 [shape = 's32[1]{0}', space=sflag, size = 0x4, scoped, tag = 'scoped memory for tpu_custom_call.1']
    #allocation7 [shape = 'u8[8192]{0}', space=vmem, size = 0x2000, scoped, tag = 'output window, operand 0, single buffered']
    %7 = vsyncpa [#allocation3], 0
    %8 = vsyncpa [#allocation6], 0
    %9 = vsyncpa [#allocation4], 0
    // Predicated region
    $region2: #{tpu_custom_call.1} parent=1 // pred_check
      _
    $region3: #{tpu_custom_call.1} parent=1 // pred_check_branch
      %11 = sbr.rel (0) target = $region5
    $region4: #{tpu_custom_call.1} parent=1 // pred_region
      %13 = vsyncadd [#allocation3], 0
      %s14 = sshll.u32 %s0, 4
      %s15 = int_to_ptr.hbm [resolvable:$true] %s14
      %s16 = sshll.u32 [#allocation2], 4
      %s17 = int_to_ptr.vmem [resolvable:$true] %s16
      %22 = dma.hbm_to_vmem [thread:$0]  %s15, 256, %s17, [#allocation3], 128, 128, 8
    $region5: #{tpu_custom_call.1} parent=1 // pred_fallthru
      _
    // Predicated region
    $region6: #{tpu_custom_call.1} parent=1 // pred_check
      _
    $region7: #{tpu_custom_call.1} parent=1 // pred_check_branch
      %24 = sbr.rel (0) target = $region9
    $region8: #{tpu_custom_call.1} parent=1 // pred_region
      %26 = vsyncadd [#allocation6], 0
      %s27 = sshll.u32 %s1, 4
      %s28 = int_to_ptr.hbm [resolvable:$true] %s27
      %s29 = sshll.u32 [#allocation5], 4
      %s30 = int_to_ptr.vmem [resolvable:$true] %s29
      %35 = dma.hbm_to_vmem [thread:$0]  %s28, 256, %s30, [#allocation6], 128, 128, 8
    $region9: #{tpu_custom_call.1} parent=1 // pred_fallthru
      _
    // Predicated region
    $region10: #{tpu_custom_call.1} parent=1 // pred_check
      _
    $region11: #{tpu_custom_call.1} parent=1 // pred_check_branch
      %37 = sbr.rel (0) target = $region13
    $region12: #{tpu_custom_call.1} parent=1 // pred_region
      %39 = dma.done [#allocation3], 256
    $region13: #{tpu_custom_call.1} parent=1 // pred_fallthru
      _
    // Predicated region
    $region14: #{tpu_custom_call.1} parent=1 // pred_check
      _
    $region15: #{tpu_custom_call.1} parent=1 // pred_check_branch
      %41 = sbr.rel (0) target = $region17
    $region16: #{tpu_custom_call.1} parent=1 // pred_region
      %43 = dma.done [#allocation6], 256
    $region17: #{tpu_custom_call.1} parent=1 // pred_fallthru
      _
    %v44 = vld [vmem:[#allocation5] sm:$0xff]
    %v45 = vshra.s32 %v44, 9
    %v46 = vand.u32 %v45, 8388607
    %v47 = vld [vmem:[#allocation5 + $0x8] sm:$0xff]
    %v48 = vshra.s32 %v47, 9
    %v49 = vand.u32 %v48, 8388607
    %v50 = vcvt.s32.f32 %v46
    %v51 = vmul.f32 %v50, 1.1920929e-07
    %v52 = vsub.f32 1.0, %v51
    %v53 = vcvt.s32.f32 %v49
    %v54 = vmul.f32 %v53, 1.1920929e-07
    %v55 = vlog2.pop %v52
    %v56 = vmul.f32 %v55, 0.6931472
    %v57 = vmul.f32 %v56, -2.0
    %v58 = vrsqrt.pop %v57
    %v59 = vmul.f32 %v58, %v57
    %v60 = vmul.f32 %v59, %v58
    %v61 = vmul.f32 0.5, %v60
    %v62 = vsub.f32 1.5, %v61
    %v63 = vmul.f32 %v58, %v62
    %v64 = vmul.f32 %v57, %v63
    %vm65 = vcmp.eq.f32.partialorder %v57, inf
    %v66 = vsel %vm65, %v57, %v64
    %vm67 = vcmp.eq.f32.partialorder %v57, 0.0
    %v68 = vand.u32 %v57, 2147483648
    %v69 = vsel %vm67, %v68, %v66
    %v70 = vmul.f32 %v54, 6.2831855
    %v71 = vand.u32 2147483647, %v70
    %vm72 = vcmp.le.f32.partialorder %v71, 0.7853982
    %vm73 = vcmp.lt.s32.totalorder %v70, 0
    %v74 = vand.u32 %v70, 2139095040
    %v75 = vshrl.u32 %v74, 23
    %v76 = vsub.s32 %v75, 127
    %v77 = vand.u32 2147483647, %v70
    %v78 = vand.u32 %v77, 8388607
    %v79 = vor.u32 %v78, 8388608
    %v80 = vsub.s32 0, %v79
    %v81 = vadd.s32 %v76, 1
    %vm82 = vcmp.gt.s32.totalorder %v81, 0
    %v83 = vsel %vm82, %v81, 0
    %v84 = vshrl.u32 %v83, 5
    %v85 = vand.u32 %v83, 31
    %v86 = vsub.s32 32, %v85
    %v87 = vshrl.u32 683565275, %v86
    %v88 = vshll.u32 683565275, %v85
    %v89 = vshrl.u32 2475754826, %v86
    %v90 = vor.u32 %v88, %v89
    %v91 = vshll.u32 2475754826, %v85
    %v92 = vshrl.u32 2131351028, %v86
    %v93 = vor.u32 %v91, %v92
    %v94 = vshll.u32 2131351028, %v85
    %v95 = vshrl.u32 2102212464, %v86
    %v96 = vor.u32 %v94, %v95
    %v97 = vshll.u32 2102212464, %v85
    %v98 = vshrl.u32 920167782, %v86
    %v99 = vor.u32 %v97, %v98
    %v100 = vshll.u32 920167782, %v85
    %v101 = vshrl.u32 1326507024, %v86
    %v102 = vor.u32 %v100, %v101
    %vm103 = vcmp.lt.s32.totalorder %v84, 1
    %vm104 = vcmp.lt.s32.totalorder %v84, 2
    %vm105 = vcmp.lt.s32.totalorder %v84, 3
    %vm106 = vcmp.lt.s32.totalorder %v84, 4
    %v107 = vsel %vm103, %v87, %v90
    %v108 = vsel %vm106, %v96, 2102212464
    %v109 = vsel %vm105, %v93, %v108
    %v110 = vsel %vm104, %v107, %v109
    %v111 = vsel %vm103, %v90, %v93
    %v112 = vsel %vm106, %v99, 920167782
    %v113 = vsel %vm105, %v96, %v112
    %v114 = vsel %vm104, %v111, %v113
    %v115 = vsel %vm103, %v93, %v96
    %v116 = vsel %vm106, %v102, 1326507024
    %v117 = vsel %vm105, %v99, %v116
    %v118 = vsel %vm104, %v115, %v117
    %v119 = vshll.u32 %v79, 8
    %v120 = vand.u32 %v119, 65535
    %v121 = vshrl.u32 %v119, 16
    %v122 = vand.u32 %v118, 65535
    %v123 = vshrl.u32 %v118, 16
    %v124 = vmul.u32 %v120, %v122
    %v125 = vmul.u32 %v120, %v123
    %v126 = vmul.u32 %v121, %v122
    %v127 = vmul.u32 %v121, %v123
    %v128 = vshll.u32 %v125, 16
    %v129 = vshrl.u32 %v125, 16
    %v130 = vshll.u32 %v126, 16
    %v131 = vshrl.u32 %v126, 16
    %vm132 = vc.u32 %v124, %v128
    %v133 = vsel %vm132, 1, 0
    %v134 = vadd.s32 %v124, %v128
    %v135 = vadd.s32 %v127, %v133
    %vm136 = vc.u32 %v134, %v130
    %v137 = vsel %vm136, 1, 0
    %v138 = vadd.s32 %v134, %v130
    %v139 = vadd.s32 %v135, %v137
    %v140 = vadd.s32 %v139, %v129
    %v141 = vadd.s32 %v140, %v131
    %v142 = vand.u32 %v119, 65535
    %v143 = vshrl.u32 %v119, 16
    %v144 = vand.u32 %v114, 65535
    %v145 = vshrl.u32 %v114, 16
    %v146 = vmul.u32 %v142, %v144
    %v147 = vmul.u32 %v142, %v145
    %v148 = vmul.u32 %v143, %v144
    %v149 = vmul.u32 %v143, %v145
    %v150 = vshll.u32 %v147, 16
    %v151 = vshrl.u32 %v147, 16
    %v152 = vshll.u32 %v148, 16
    %v153 = vshrl.u32 %v148, 16
    %vm154 = vc.u32 %v146, %v150
    %v155 = vsel %vm154, 1, 0
    %v156 = vadd.s32 %v146, %v150
    %v157 = vadd.s32 %v149, %v155
    %vm158 = vc.u32 %v156, %v152
    %v159 = vsel %vm158, 1, 0
    %v160 = vadd.s32 %v156, %v152
    %v161 = vadd.s32 %v157, %v159
    %v162 = vadd.s32 %v161, %v151
    %v163 = vadd.s32 %v162, %v153
    %v164 = vmul.u32 %v119, %v110
    %v165 = vadd.s32 %v141, %v160
    %vm166 = vc.u32 %v141, %v160
    %v167 = vadd.s32 %v163, 1
    %v168 = vsel %vm166, %v167, %v163
    %v169 = vadd.s32 %v164, %v168
    %v170 = vadd.s32 %v169, 536870912
    %v171 = vshrl.u32 %v170, 30
    %v172 = vshll.u32 %v171, 30
    %v173 = vsub.s32 %v169, %v172
    %vm174 = vcmp.lt.s32.totalorder %v173, 0
    %v175 = vsub.s32 0, %v173
    %v176 = vsel %vm174, %v175, %v173
    %v177 = vclz %v176
    %v178 = vsub.s32 %v177, 2
    %vm179 = vcmp.gt.s32.totalorder 0, %v178
    %v180 = vsel %vm179, 0, %v178
    %v181 = vsub.s32 32, %v180
    %v182 = vshll.u32 %v173, %v180
    %v183 = vshrl.u32 %v165, %v181
    %v184 = vor.u32 %v182, %v183
    %v185 = vsub.s32 4294967266, %v180
    %v186 = vadd.s32 %v185, 127
    %v187 = vshll.u32 %v186, 23
    %v188 = vor.u32 4788187, %v187
    %v189 = vand.u32 2147483647, %v188
    %v191 = vcvt.s32.f32 %v184
    %v192 = vmul.f32 %v191, %v189
    %v193 = vxor.u32 %v192, 2147483648
    %v194 = vsel %vm73, %v193, %v192
    %v195 = vsub.s32 4, %v171
    %v196 = vsel %vm73, %v195, %v171
    %v197 = vsel %vm72, %v70, %v194
    %v198 = vsel %vm72, 0, %v196
    %v199 = vmul.f32 %v197, %v197
    %v200 = vmul.f32 %v199, -0.001358992
    %v201 = vadd.f32 %v200, 0.041655596
    %v202 = vmul.f32 %v199, %v201
    %v203 = vadd.f32 %v202, -0.4999988
    %v204 = vmul.f32 %v199, %v203
    %v205 = vadd.f32 1.0, %v204
    %v206 = vmul.f32 %v197, %v197
    %v207 = vmul.f32 %v206, -0.00019511016
    %v208 = vadd.f32 %v207, 0.008332121
    %v209 = vmul.f32 %v206, %v208
    %v210 = vadd.f32 %v209, -0.16666654
    %v211 = vmul.f32 %v206, %v210
    %v212 = vadd.f32 %v211, 1.0
    %v213 = vmul.f32 %v212, %v197
    %vm214 = vweird.f32 %v70
    %v215 = vand.u32 %v198, 3
    %vm216 = vcmp.lt.s32.totalorder %v215, 2
    %vm217 = vcmp.eq.s32.totalorder %v215, 0
    %v218 = vxor.u32 %v213, 2147483648
    %v219 = vsel %vm217, %v205, %v218
    %vm220 = vcmp.eq.s32.totalorder %v215, 2
    %v221 = vxor.u32 %v205, 2147483648
    %v222 = vsel %vm220, %v221, %v213
    %v223 = vsel %vm216, %v219, %v222
    %v224 = vsel %vm214, nan, %v223
    %v225 = vmul.f32 %v69, %v224
    %v226 = vand.u32 2147483647, %v70
    %vm227 = vcmp.le.f32.partialorder %v226, 0.7853982
    %vm228 = vcmp.lt.s32.totalorder %v70, 0
    %v229 = vand.u32 %v70, 2139095040
    %v230 = vshrl.u32 %v229, 23
    %v231 = vsub.s32 %v230, 127
    %v232 = vand.u32 2147483647, %v70
    %v233 = vand.u32 %v232, 8388607
    %v234 = vor.u32 %v233, 8388608
    %v235 = vsub.s32 0, %v234
    %v236 = vadd.s32 %v231, 1
    %vm237 = vcmp.gt.s32.totalorder %v236, 0
    %v238 = vsel %vm237, %v236, 0
    %v239 = vshrl.u32 %v238, 5
    %v240 = vand.u32 %v238, 31
    %v241 = vsub.s32 32, %v240
    %v242 = vshrl.u32 683565275, %v241
    %v243 = vshll.u32 683565275, %v240
    %v244 = vshrl.u32 2475754826, %v241
    %v245 = vor.u32 %v243, %v244
    %v246 = vshll.u32 2475754826, %v240
    %v247 = vshrl.u32 2131351028, %v241
    %v248 = vor.u32 %v246, %v247
    %v249 = vshll.u32 2131351028, %v240
    %v250 = vshrl.u32 2102212464, %v241
    %v251 = vor.u32 %v249, %v250
    %v252 = vshll.u32 2102212464, %v240
    %v253 = vshrl.u32 920167782, %v241
    %v254 = vor.u32 %v252, %v253
    %v255 = vshll.u32 920167782, %v240
    %v256 = vshrl.u32 1326507024, %v241
    %v257 = vor.u32 %v255, %v256
    %vm258 = vcmp.lt.s32.totalorder %v239, 1
    %vm259 = vcmp.lt.s32.totalorder %v239, 2
    %vm260 = vcmp.lt.s32.totalorder %v239, 3
    %vm261 = vcmp.lt.s32.totalorder %v239, 4
    %v262 = vsel %vm258, %v242, %v245
    %v263 = vsel %vm261, %v251, 2102212464
    %v264 = vsel %vm260, %v248, %v263
    %v265 = vsel %vm259, %v262, %v264
    %v266 = vsel %vm258, %v245, %v248
    %v267 = vsel %vm261, %v254, 920167782
    %v268 = vsel %vm260, %v251, %v267
    %v269 = vsel %vm259, %v266, %v268
    %v270 = vsel %vm258, %v248, %v251
    %v271 = vsel %vm261, %v257, 1326507024
    %v272 = vsel %vm260, %v254, %v271
    %v273 = vsel %vm259, %v270, %v272
    %v274 = vshll.u32 %v234, 8
    %v275 = vand.u32 %v274, 65535
    %v276 = vshrl.u32 %v274, 16
    %v277 = vand.u32 %v273, 65535
    %v278 = vshrl.u32 %v273, 16
    %v279 = vmul.u32 %v275, %v277
    %v280 = vmul.u32 %v275, %v278
    %v281 = vmul.u32 %v276, %v277
    %v282 = vmul.u32 %v276, %v278
    %v283 = vshll.u32 %v280, 16
    %v284 = vshrl.u32 %v280, 16
    %v285 = vshll.u32 %v281, 16
    %v286 = vshrl.u32 %v281, 16
    %vm287 = vc.u32 %v279, %v283
    %v288 = vsel %vm287, 1, 0
    %v289 = vadd.s32 %v279, %v283
    %v290 = vadd.s32 %v282, %v288
    %vm291 = vc.u32 %v289, %v285
    %v292 = vsel %vm291, 1, 0
    %v293 = vadd.s32 %v289, %v285
    %v294 = vadd.s32 %v290, %v292
    %v295 = vadd.s32 %v294, %v284
    %v296 = vadd.s32 %v295, %v286
    %v297 = vand.u32 %v274, 65535
    %v298 = vshrl.u32 %v274, 16
    %v299 = vand.u32 %v269, 65535
    %v300 = vshrl.u32 %v269, 16
    %v301 = vmul.u32 %v297, %v299
    %v302 = vmul.u32 %v297, %v300
    %v303 = vmul.u32 %v298, %v299
    %v304 = vmul.u32 %v298, %v300
    %v305 = vshll.u32 %v302, 16
    %v306 = vshrl.u32 %v302, 16
    %v307 = vshll.u32 %v303, 16
    %v308 = vshrl.u32 %v303, 16
    %vm309 = vc.u32 %v301, %v305
    %v310 = vsel %vm309, 1, 0
    %v311 = vadd.s32 %v301, %v305
    %v312 = vadd.s32 %v304, %v310
    %vm313 = vc.u32 %v311, %v307
    %v314 = vsel %vm313, 1, 0
    %v315 = vadd.s32 %v311, %v307
    %v316 = vadd.s32 %v312, %v314
    %v317 = vadd.s32 %v316, %v306
    %v318 = vadd.s32 %v317, %v308
    %v319 = vmul.u32 %v274, %v265
    %v320 = vadd.s32 %v296, %v315
    %vm321 = vc.u32 %v296, %v315
    %v322 = vadd.s32 %v318, 1
    %v323 = vsel %vm321, %v322, %v318
    %v324 = vadd.s32 %v319, %v323
    %v325 = vadd.s32 %v324, 536870912
    %v326 = vshrl.u32 %v325, 30
    %v327 = vshll.u32 %v326, 30
    %v328 = vsub.s32 %v324, %v327
    %vm329 = vcmp.lt.s32.totalorder %v328, 0
    %v330 = vsub.s32 0, %v328
    %v331 = vsel %vm329, %v330, %v328
    %v332 = vclz %v331
    %v333 = vsub.s32 %v332, 2
    %vm334 = vcmp.gt.s32.totalorder 0, %v333
    %v335 = vsel %vm334, 0, %v333
    %v336 = vsub.s32 32, %v335
    %v337 = vshll.u32 %v328, %v335
    %v338 = vshrl.u32 %v320, %v336
    %v339 = vor.u32 %v337, %v338
    %v340 = vsub.s32 4294967266, %v335
    %v341 = vadd.s32 %v340, 127
    %v342 = vshll.u32 %v341, 23
    %v343 = vor.u32 4788187, %v342
    %v344 = vand.u32 2147483647, %v343
    %v346 = vcvt.s32.f32 %v339
    %v347 = vmul.f32 %v346, %v344
    %v348 = vxor.u32 %v347, 2147483648
    %v349 = vsel %vm228, %v348, %v347
    %v350 = vsub.s32 4, %v326
    %v351 = vsel %vm228, %v350, %v326
    %v352 = vsel %vm227, %v70, %v349
    %v353 = vsel %vm227, 0, %v351
    %v354 = vmul.f32 %v352, %v352
    %v355 = vmul.f32 %v354, -0.001358992
    %v356 = vadd.f32 %v355, 0.041655596
    %v357 = vmul.f32 %v354, %v356
    %v358 = vadd.f32 %v357, -0.4999988
    %v359 = vmul.f32 %v354, %v358
    %v360 = vadd.f32 1.0, %v359
    %v361 = vmul.f32 %v352, %v352
    %v362 = vmul.f32 %v361, -0.00019511016
    %v363 = vadd.f32 %v362, 0.008332121
    %v364 = vmul.f32 %v361, %v363
    %v365 = vadd.f32 %v364, -0.16666654
    %v366 = vmul.f32 %v361, %v365
    %v367 = vadd.f32 %v366, 1.0
    %v368 = vmul.f32 %v367, %v352
    %vm369 = vweird.f32 %v70
    %v370 = vadd.s32 %v353, 3
    %v371 = vand.u32 %v370, 3
    %vm372 = vcmp.lt.s32.totalorder %v371, 2
    %vm373 = vcmp.eq.s32.totalorder %v371, 0
    %v374 = vxor.u32 %v368, 2147483648
    %v375 = vsel %vm373, %v360, %v374
    %vm376 = vcmp.eq.s32.totalorder %v371, 2
    %v377 = vxor.u32 %v360, 2147483648
    %v378 = vsel %vm376, %v377, %v368
    %v379 = vsel %vm372, %v375, %v378
    %v380 = vsel %vm369, nan, %v379
    %v381 = vmul.f32 %v69, %v380
    %v382 = vld [vmem:[#allocation2] sm:$0xff]
    %v383 = vld [vmem:[#allocation2 + $0x8] sm:$0xff]
    %v384 = vadd.f32 %v382, %v225
    %385 = vst [vmem:[#allocation7] sm:$0xff] %v384
    %v386 = vadd.f32 %v383, %v381
    %387 = vst [vmem:[#allocation7 + $0x8] sm:$0xff] %v386
    // Predicated region
    $region18: #{tpu_custom_call.1} parent=1 // pred_check
      _
    $region19: #{tpu_custom_call.1} parent=1 // pred_check_branch
      %389 = sbr.rel (0) target = $region21
    $region20: #{tpu_custom_call.1} parent=1 // pred_region
      %391 = vsyncadd [#allocation4], 0
      %s392 = sshll.u32 [#allocation7], 4
      %s393 = int_to_ptr.vmem [resolvable:$true] %s392
      %s394 = sshll.u32 %s2, 4
      %s395 = int_to_ptr.hbm [resolvable:$true] %s394
      %400 = dma.vmem_to_hbm [thread:$0]  %s393, 256, %s395, [#allocation4], 128, 128, 8
    $region21: #{tpu_custom_call.1} parent=1 // pred_fallthru
      _
    // Predicated region
    $region22: #{tpu_custom_call.1} parent=1 // pred_check
      _
    $region23: #{tpu_custom_call.1} parent=1 // pred_check_branch
      %402 = sbr.rel (0) target = $region25
    $region24: #{tpu_custom_call.1} parent=1 // pred_region
      %404 = dma.done [#allocation4], 256
    $region25: #{tpu_custom_call.1} parent=1 // pred_fallthru
      _
    %405 = vsyncpa [#allocation3], 1
    %406 = vsyncpa [#allocation6], 1
    %407 = vsyncpa [#allocation4], 1

</llo_original>
